<compile_context>
chip_gen: v7x
topology: tpu7x:2x2x1
jax: 0.10.0
libtpu: 0.0.40
codegen_flags: <defaults>
</compile_context>

<pallas_src>
import math

import jax
import jax.numpy as jnp
from jax.experimental import pallas as pl
from jax.experimental.pallas import tpu as pltpu

# ---- problem sizes (small, consistent with the module) ----
BATCH = 16          # N
STATE = 32          # state_size
HIDDEN = 128        # hidden_size (module default)
ACTION = 8          # action_size
NUM_HEADS = 4
HEAD_DIM = HIDDEN // NUM_HEADS
LN_EPS = 1e-5
OUT_PAD = 128       # lane-dense output width (ACTION padded to one full 128-lane vreg)


def selfattn_kernel(x_ref, w1_ref, bias_ref, wstack_ref, out_ref):
    f32 = jnp.float32
    x = x_ref[...]

    # packed biases: row 0 = b1, 1 = b2, 2 = bvo, 3 = b3g (static slices -> zero cost)
    b1 = bias_ref[0:1, :]
    b2 = bias_ref[1:2, :]
    bvo = bias_ref[2:3, :]
    b3g = bias_ref[3:4, :]

    # fc1 + sigmoid
    h1 = jax.nn.sigmoid(
        jnp.dot(x, w1_ref[...], preferred_element_type=f32) + b1)

    # fc2 + relu
    h2 = jnp.maximum(
        jnp.dot(h1, wstack_ref[0], preferred_element_type=f32) + b2, 0.0)

    # MultiheadAttention with seq_len == 1: softmax over a single key is identically 1,
    # so attn == out_proj(v_proj(h2)).  The wrapper pre-folds wv@wo (+bias) AND the
    # residual identity, so attn_out + h2 is one (N,128)x(128,128) MXU matmul.
    y = jnp.dot(h2, wstack_ref[1], preferred_element_type=f32) + bvo

    # LayerNorm (population variance, eps=1e-5); affine gamma/beta folded into fc3 offline.
    mean = jnp.mean(y, axis=-1, keepdims=True)
    var = jnp.mean((y - mean) * (y - mean), axis=-1, keepdims=True)
    z = (y - mean) * jax.lax.rsqrt(var + LN_EPS)

    # fc3 + sigmoid (gamma/beta pre-folded; lane-dense 128-wide, sliced outside)
    out = jax.nn.sigmoid(
        jnp.dot(z, wstack_ref[2], preferred_element_type=f32) + b3g)
    out_ref[...] = out.astype(out_ref.dtype)


def prepare_params(params):
    """One-time offline folds (done once, NOT per forward call)."""
    (w1, b1, w2, b2, wq, bq, wk, bk, wv, bv, wo, bo, gamma, beta, w3, b3) = params

    # Fold dead attention path (seq_len==1): attn_out = h2 @ (wv @ wo) + (bv @ wo + bo)
    wvo = wv @ wo
    bvo = bv @ wo + bo
    # Fold the residual (attn_out + h2) into the weight.
    wvo_res = wvo + jnp.eye(HIDDEN, dtype=jnp.float32)

    # Pad fc3 to a lane-dense 128-wide output, then fold the LayerNorm affine into it:
    #   (z*gamma + beta) @ w3 + b3 == z @ (gamma[:,None]*w3) + (beta @ w3 + b3)
    w3p = jnp.zeros((HIDDEN, OUT_PAD), jnp.float32).at[:, :ACTION].set(w3)
    b3p = jnp.zeros((1, OUT_PAD), jnp.float32).at[:, :ACTION].set(b3)
    w3g = gamma.reshape(HIDDEN, 1) * w3p
    b3g = beta @ w3p + b3p

    # Pack the four (1,128) biases into one (8,128) operand (one DMA instead of four).
    bias_pack = (jnp.zeros((8, OUT_PAD), jnp.float32)
                 .at[0, :].set(b1[0])
                 .at[1, :].set(b2[0])
                 .at[2, :].set(bvo[0])
                 .at[3, :].set(b3g[0]))

    # Stack the three (128,128) weights into one operand.
    wstack = jnp.stack([w2, wvo_res, w3g], axis=0)

    return (w1, bias_pack, wstack)


@jax.jit
def self_attention_forward(x, prepared):
    w1, bias_pack, wstack = prepared
    n, s = x.shape

    vmem = pl.BlockSpec(memory_space=pltpu.MemorySpace.VMEM)

    out_padded = pl.pallas_call(
        selfattn_kernel,
        out_shape=jax.ShapeDtypeStruct((n, OUT_PAD), jnp.float32),
        in_specs=[vmem, vmem, vmem, vmem],
        out_specs=vmem,
    )(x, w1, bias_pack, wstack)

    return out_padded[:, :ACTION]


def init_params(key):
    """Deterministic synthetic parameters matching the torch module's shapes.

    torch shapes: fc1.weight (H,S), fc2.weight (H,H), fc3.weight (A,H),
    attention.in_proj_weight (3H,H), attention.out_proj.weight (H,H),
    norm.weight/bias (H,).  All matmul weights are stored transposed as (in, out)
    and biases as (1, dim) for lane broadcasting.
    """
    ks = jax.random.split(key, 12)
    u = lambda k, shape, scale: jax.random.uniform(k, shape, jnp.float32, -scale, scale)

    w1 = u(ks[0], (STATE, HIDDEN), 1.0 / math.sqrt(STATE))
    b1 = u(ks[1], (1, HIDDEN), 1.0 / math.sqrt(STATE))
    w2 = u(ks[2], (HIDDEN, HIDDEN), 1.0 / math.sqrt(HIDDEN))
    b2 = u(ks[3], (1, HIDDEN), 1.0 / math.sqrt(HIDDEN))
    # in_proj (3H, H) split into q/k/v, each stored as (H, H) = W^T
    wq = u(ks[4], (HIDDEN, HIDDEN), 1.0 / math.sqrt(HIDDEN))
    wk = u(ks[5], (HIDDEN, HIDDEN), 1.0 / math.sqrt(HIDDEN))
    wv = u(ks[6], (HIDDEN, HIDDEN), 1.0 / math.sqrt(HIDDEN))
    bq = jnp.zeros((1, HIDDEN), jnp.float32)
    bk = jnp.zeros((1, HIDDEN), jnp.float32)
    bv = u(ks[10], (1, HIDDEN), 1.0 / math.sqrt(HIDDEN))
    wo = u(ks[7], (HIDDEN, HIDDEN), 1.0 / math.sqrt(HIDDEN))
    bo = u(ks[11], (1, HIDDEN), 1.0 / math.sqrt(HIDDEN))
    # non-trivial gamma/beta so the LayerNorm-affine fold is actually exercised
    gamma = 1.0 + 0.1 * u(ks[8], (1, HIDDEN), 1.0)
    beta = 0.1 * u(ks[9], (1, HIDDEN), 1.0)
    w3 = u(ks[8], (HIDDEN, ACTION), 1.0 / math.sqrt(HIDDEN))
    b3 = u(ks[9], (1, ACTION), 1.0 / math.sqrt(HIDDEN))

    return (w1, b1, w2, b2, wq, bq, wk, bk, wv, bv, wo, bo, gamma, beta, w3, b3)


def reference_forward(x, params):
    """Pure-JAX reference mirroring the torch module (eval mode), full attention math."""
    (w1, b1, w2, b2, wq, bq, wk, bk, wv, bv, wo, bo, gamma, beta, w3, b3) = params
    h1 = jax.nn.sigmoid(x @ w1 + b1)
    h2 = jax.nn.relu(h1 @ w2 + b2)
    q, k, v = h2 @ wq + bq, h2 @ wk + bk, h2 @ wv + bv
    scale = 1.0 / math.sqrt(HEAD_DIM)
    outs = []
    for h in range(NUM_HEADS):
        sl = slice(h * HEAD_DIM, (h + 1) * HEAD_DIM)
        s = jnp.sum(q[:, sl] * k[:, sl], axis=-1, keepdims=True) * scale
        w = jax.nn.softmax(s[..., None], axis=-1)[..., 0]  # length-1 softmax == 1
        outs.append(w * v[:, sl])
    attn = jnp.concatenate(outs, axis=-1) @ wo + bo
    y = attn + h2
    mean = jnp.mean(y, axis=-1, keepdims=True)
    var = jnp.mean((y - mean) ** 2, axis=-1, keepdims=True)
    y = (y - mean) * jax.lax.rsqrt(var + LN_EPS) * gamma + beta
    return jax.nn.sigmoid(y @ w3 + b3)


if __name__ == "__main__":
    key = jax.random.PRNGKey(0)
    kx, kp = jax.random.split(key)
    x = jax.random.normal(kx, (BATCH, STATE), jnp.float32)
    params = init_params(kp)

    prepared = prepare_params(params)          # one-time offline fold
    out = self_attention_forward(x, prepared)  # jitted: pallas_call + output slice
    out = jax.block_until_ready(out)

    ref = reference_forward(x, params)
    assert out.shape == (BATCH, ACTION)
    assert jnp.allclose(out, ref, atol=1e-4, rtol=1e-4)

    print("KERNEL_OK")
</pallas_src>

<mosaic_0001>
module attributes {stable_mosaic.version = 11 : i64} {
  func.func @selfattn_kernel(%arg0: memref<16x32xf32, #tpu.memory_space<vmem>>, %arg1: memref<32x128xf32, #tpu.memory_space<vmem>>, %arg2: memref<8x128xf32, #tpu.memory_space<vmem>>, %arg3: memref<3x128x128xf32, #tpu.memory_space<vmem>>, %arg4: memref<16x128xf32, #tpu.memory_space<vmem>>) attributes {dimension_semantics = [], scalar_prefetch = 0 : i64, scratch_operands = 0 : i64, tpu.core_type = #tpu.core_type<tc>} {
    %c0 = arith.constant 0 : index
    %c0_0 = arith.constant 0 : index
    %0 = vector.load %arg0[%c0, %c0_0] : memref<16x32xf32, #tpu.memory_space<vmem>>, vector<16x32xf32>
    %c0_1 = arith.constant 0 : index
    %c0_2 = arith.constant 0 : index
    %1 = vector.load %arg2[%c0_1, %c0_2] : memref<8x128xf32, #tpu.memory_space<vmem>>, vector<1x128xf32>
    %c1 = arith.constant 1 : index
    %c0_3 = arith.constant 0 : index
    %2 = vector.load %arg2[%c1, %c0_3] : memref<8x128xf32, #tpu.memory_space<vmem>>, vector<1x128xf32>
    %c2 = arith.constant 2 : index
    %c0_4 = arith.constant 0 : index
    %3 = vector.load %arg2[%c2, %c0_4] : memref<8x128xf32, #tpu.memory_space<vmem>>, vector<1x128xf32>
    %c3 = arith.constant 3 : index
    %c0_5 = arith.constant 0 : index
    %4 = vector.load %arg2[%c3, %c0_5] : memref<8x128xf32, #tpu.memory_space<vmem>>, vector<1x128xf32>
    %c0_6 = arith.constant 0 : index
    %c0_7 = arith.constant 0 : index
    %5 = vector.load %arg1[%c0_6, %c0_7] : memref<32x128xf32, #tpu.memory_space<vmem>>, vector<32x128xf32>
    %cst = arith.constant dense<0.000000e+00> : vector<16x128xf32>
    %6 = tpu.matmul %0, %5, %cst {dimension_numbers = #tpu.dot_dimension_numbers<[1], [0], [0], [1], [0, 0, 1, 1], [], []>} : vector<16x32xf32>, vector<32x128xf32>, vector<16x128xf32> -> vector<16x128xf32>
    %7 = vector.broadcast %1 : vector<1x128xf32> to vector<16x128xf32>
    %8 = arith.addf %6, %7 : vector<16x128xf32>
    %9 = arith.negf %8 : vector<16x128xf32>
    %10 = math.exp %9 : vector<16x128xf32>
    %cst_8 = arith.constant 1.000000e+00 : f32
    %11 = vector.broadcast %cst_8 : f32 to vector<16x128xf32>
    %12 = arith.addf %11, %10 : vector<16x128xf32>
    %13 = arith.divf %11, %12 : vector<16x128xf32>
    %c0_9 = arith.constant 0 : index
    %c0_10 = arith.constant 0 : index
    %c0_11 = arith.constant 0 : index
    %14 = vector.load %arg3[%c0_9, %c0_10, %c0_11] : memref<3x128x128xf32, #tpu.memory_space<vmem>>, vector<1x128x128xf32>
    %15 = vector.shape_cast %14 : vector<1x128x128xf32> to vector<128x128xf32>
    %cst_12 = arith.constant dense<0.000000e+00> : vector<16x128xf32>
    %16 = tpu.matmul %13, %15, %cst_12 {dimension_numbers = #tpu.dot_dimension_numbers<[1], [0], [0], [1], [0, 0, 1, 1], [], []>} : vector<16x128xf32>, vector<128x128xf32>, vector<16x128xf32> -> vector<16x128xf32>
    %17 = vector.broadcast %2 : vector<1x128xf32> to vector<16x128xf32>
    %18 = arith.addf %16, %17 : vector<16x128xf32>
    %cst_13 = arith.constant 0.000000e+00 : f32
    %19 = vector.broadcast %cst_13 : f32 to vector<16x128xf32>
    %20 = arith.maximumf %18, %19 : vector<16x128xf32>
    %c1_14 = arith.constant 1 : index
    %c0_15 = arith.constant 0 : index
    %c0_16 = arith.constant 0 : index
    %21 = vector.load %arg3[%c1_14, %c0_15, %c0_16] : memref<3x128x128xf32, #tpu.memory_space<vmem>>, vector<1x128x128xf32>
    %22 = vector.shape_cast %21 : vector<1x128x128xf32> to vector<128x128xf32>
    %cst_17 = arith.constant dense<0.000000e+00> : vector<16x128xf32>
    %23 = tpu.matmul %20, %22, %cst_17 {dimension_numbers = #tpu.dot_dimension_numbers<[1], [0], [0], [1], [0, 0, 1, 1], [], []>} : vector<16x128xf32>, vector<128x128xf32>, vector<16x128xf32> -> vector<16x128xf32>
    %24 = vector.broadcast %3 : vector<1x128xf32> to vector<16x128xf32>
    %25 = arith.addf %23, %24 : vector<16x128xf32>
    %cst_18 = arith.constant dense<0.000000e+00> : vector<16xf32>
    %26 = vector.multi_reduction <add>, %25, %cst_18 [1] : vector<16x128xf32> to vector<16xf32>
    %27 = vector.shape_cast %26 : vector<16xf32> to vector<16x1xf32>
    %cst_19 = arith.constant 1.280000e+02 : f32
    %28 = vector.broadcast %cst_19 : f32 to vector<16x1xf32>
    %29 = arith.divf %27, %28 : vector<16x1xf32>
    %30 = vector.broadcast %29 : vector<16x1xf32> to vector<16x128xf32>
    %31 = arith.subf %25, %30 : vector<16x128xf32>
    %32 = vector.broadcast %29 : vector<16x1xf32> to vector<16x128xf32>
    %33 = arith.subf %25, %32 : vector<16x128xf32>
    %34 = arith.mulf %31, %33 : vector<16x128xf32>
    %cst_20 = arith.constant dense<0.000000e+00> : vector<16xf32>
    %35 = vector.multi_reduction <add>, %34, %cst_20 [1] : vector<16x128xf32> to vector<16xf32>
    %36 = vector.shape_cast %35 : vector<16xf32> to vector<16x1xf32>
    %cst_21 = arith.constant 1.280000e+02 : f32
    %37 = vector.broadcast %cst_21 : f32 to vector<16x1xf32>
    %38 = arith.divf %36, %37 : vector<16x1xf32>
    %39 = vector.broadcast %29 : vector<16x1xf32> to vector<16x128xf32>
    %40 = arith.subf %25, %39 : vector<16x128xf32>
    %cst_22 = arith.constant 9.99999974E-6 : f32
    %41 = vector.broadcast %cst_22 : f32 to vector<16x1xf32>
    %42 = arith.addf %38, %41 : vector<16x1xf32>
    %43 = math.rsqrt %42 : vector<16x1xf32>
    %44 = vector.broadcast %43 : vector<16x1xf32> to vector<16x128xf32>
    %45 = arith.mulf %40, %44 : vector<16x128xf32>
    %c2_23 = arith.constant 2 : index
    %c0_24 = arith.constant 0 : index
    %c0_25 = arith.constant 0 : index
    %46 = vector.load %arg3[%c2_23, %c0_24, %c0_25] : memref<3x128x128xf32, #tpu.memory_space<vmem>>, vector<1x128x128xf32>
    %47 = vector.shape_cast %46 : vector<1x128x128xf32> to vector<128x128xf32>
    %cst_26 = arith.constant dense<0.000000e+00> : vector<16x128xf32>
    %48 = tpu.matmul %45, %47, %cst_26 {dimension_numbers = #tpu.dot_dimension_numbers<[1], [0], [0], [1], [0, 0, 1, 1], [], []>} : vector<16x128xf32>, vector<128x128xf32>, vector<16x128xf32> -> vector<16x128xf32>
    %49 = vector.broadcast %4 : vector<1x128xf32> to vector<16x128xf32>
    %50 = arith.addf %48, %49 : vector<16x128xf32>
    %51 = arith.negf %50 : vector<16x128xf32>
    %52 = math.exp %51 : vector<16x128xf32>
    %cst_27 = arith.constant 1.000000e+00 : f32
    %53 = vector.broadcast %cst_27 : f32 to vector<16x128xf32>
    %54 = arith.addf %53, %52 : vector<16x128xf32>
    %55 = arith.divf %53, %54 : vector<16x128xf32>
    %c0_28 = arith.constant 0 : index
    %c0_29 = arith.constant 0 : index
    %56 = vector.load %arg4[%c0_28, %c0_29] : memref<16x128xf32, #tpu.memory_space<vmem>>, vector<16x128xf32>
    tpu.vector_store %arg4[%c0_28, %c0_29], %55 {strides = array<i32>} : memref<16x128xf32, #tpu.memory_space<vmem>>, vector<16x128xf32>,
    return
  }
}

</mosaic_0001>

<llo_original>
// kernel: self_attention_forward.1
$region0: #{self_attention_forward.1}
  #allocation0 [shape = 'u32[]', space=smem, size = 0x4, offset = 0x4, fixed_abs, tag = 'smem constant byte address 0x4 - core index']
  #allocation1 [shape = 'u32[144,128]{1,0:T(1,128)}', space=vmem, size = 0x12000, scoped, tag = 'internal scratch']
  %s0 = inlined_call_operand.hbm [shape: f32[16,32], index: 0, kind: input, shape index: {}]
  %s1 = inlined_call_operand.hbm [shape: f32[32,128], index: 1, kind: input, shape index: {}]
  %s2 = inlined_call_operand.hbm [shape: f32[8,128], index: 2, kind: input, shape index: {}]
  %s3 = inlined_call_operand.hbm [shape: f32[3,128,128], index: 3, kind: input, shape index: {}]
  %s4 = inlined_call_operand.vmem [shape: f32[16,128], index: 4, kind: output, shape index: {}]
  %s5 = sld [smem:[#allocation0]]
  $region42: #{self_attention_forward.1} parent=0
    _
  %s7 = ssub.s32 1, %s5
  %s8 = scalar_select 0, %s7, %s5
  $region1: #{self_attention_forward.1} parent=0
    #allocation2 [shape = 'u8[8192]{0}', space=vmem, size = 0x2000, scoped, tag = 'input window, operand 0, single buffered']
    #allocation3 [shape = 's32[1]{0}', space=sflag, size = 0x4, scoped, tag = 'scoped memory for self_attention_forward.1']
    #allocation4 [shape = 'u8[16384]{0}', space=vmem, size = 0x4000, scoped, tag = 'input window, operand 1, single buffered']
    #allocation5 [shape = 's32[1]{0}', space=sflag, size = 0x4, scoped, tag = 'scoped memory for self_attention_forward.1']
    #allocation6 [shape = 'u8[4096]{0}', space=vmem, size = 0x1000, scoped, tag = 'input window, operand 2, single buffered']
    #allocation7 [shape = 'u8[196608]{0}', space=vmem, size = 0x30000, scoped, tag = 'input window, operand 3, single buffered']
    #allocation8 [shape = 's32[1]{0}', space=sflag, size = 0x4, scoped, tag = 'scoped memory for self_attention_forward.1']
    %9 = vsyncpa [#allocation3], 0
    %10 = vsyncpa [#allocation5], 0
    %11 = vsyncpa [#allocation8], 0
    // Predicated region
    $region2: #{self_attention_forward.1} parent=1 // pred_check
      _
    $region3: #{self_attention_forward.1} parent=1 // pred_check_branch
      %13 = sbr.rel (0) target = $region5
    $region4: #{self_attention_forward.1} parent=1 // pred_region
      %s15 = ssub.s32 256, 256
      %16 = vsyncadd [#allocation3], %s15
      %s17 = sshll.u32 [#allocation2], 4
      %s18 = int_to_ptr.vmem [resolvable:$true] %s17
      %23 = dma.hbm_to_vmem [thread:$0]  %s0, 256, %s18, [#allocation3], 128, 128, 8
    $region5: #{self_attention_forward.1} parent=1 // pred_fallthru
      _
    // Predicated region
    $region6: #{self_attention_forward.1} parent=1 // pred_check
      _
    $region7: #{self_attention_forward.1} parent=1 // pred_check_branch
      %25 = sbr.rel (0) target = $region9
    $region8: #{self_attention_forward.1} parent=1 // pred_region
      %s27 = ssub.s32 512, 512
      %28 = vsyncadd [#allocation5], %s27
      %s29 = sshll.u32 [#allocation4], 4
      %s30 = int_to_ptr.vmem [resolvable:$true] %s29
      %35 = dma.hbm_to_vmem [thread:$0]  %s1, 512, %s30, [#allocation5], 128, 128, 8
    $region9: #{self_attention_forward.1} parent=1 // pred_fallthru
      _
    // Predicated region
    $region10: #{self_attention_forward.1} parent=1 // pred_check
      _
    $region11: #{self_attention_forward.1} parent=1 // pred_check_branch
      %37 = sbr.rel (0) target = $region13
    $region12: #{self_attention_forward.1} parent=1 // pred_region
      %s39 = ssub.s32 128, 128
      %40 = vsyncadd [#allocation5], %s39
      %s42 = sshll.u32 [#allocation6], 4
      %s43 = int_to_ptr.vmem [resolvable:$true] %s42
      %45 = dma.hbm_to_vmem [thread:$0]  %s2, 128, %s43, [#allocation5]
    $region13: #{self_attention_forward.1} parent=1 // pred_fallthru
      _
    // Predicated region
    $region14: #{self_attention_forward.1} parent=1 // pred_check
      _
    $region15: #{self_attention_forward.1} parent=1 // pred_check_branch
      %47 = sbr.rel (0) target = $region17
    $region16: #{self_attention_forward.1} parent=1 // pred_region
      %s49 = ssub.s32 6144, 6144
      %50 = vsyncadd [#allocation8], %s49
      %s51 = sshll.u32 [#allocation7], 4
      %s52 = int_to_ptr.vmem [resolvable:$true] %s51
      %57 = dma.hbm_to_vmem [thread:$0]  %s3, 6144, %s52, [#allocation8], 128, 128, 8
    $region17: #{self_attention_forward.1} parent=1 // pred_fallthru
      _
    // Predicated region
    $region18: #{self_attention_forward.1} parent=1 // pred_check
      _
    $region19: #{self_attention_forward.1} parent=1 // pred_check_branch
      %59 = sbr.rel (0) target = $region21
    $region20: #{self_attention_forward.1} parent=1 // pred_region
      %60 = dma.done [#allocation3], 256
    $region21: #{self_attention_forward.1} parent=1 // pred_fallthru
      _
    // Predicated region
    $region22: #{self_attention_forward.1} parent=1 // pred_check
      _
    $region23: #{self_attention_forward.1} parent=1 // pred_check_branch
      %62 = sbr.rel (0) target = $region25
    $region24: #{self_attention_forward.1} parent=1 // pred_region
      %63 = dma.done [#allocation5], 512
    $region25: #{self_attention_forward.1} parent=1 // pred_fallthru
      _
    // Predicated region
    $region26: #{self_attention_forward.1} parent=1 // pred_check
      _
    $region27: #{self_attention_forward.1} parent=1 // pred_check_branch
      %65 = sbr.rel (0) target = $region29
    $region28: #{self_attention_forward.1} parent=1 // pred_region
      %66 = dma.done [#allocation5], 128
    $region29: #{self_attention_forward.1} parent=1 // pred_fallthru
      _
    // Predicated region
    $region30: #{self_attention_forward.1} parent=1 // pred_check
      _
    $region31: #{self_attention_forward.1} parent=1 // pred_check_branch
      %68 = sbr.rel (0) target = $region33
    $region32: #{self_attention_forward.1} parent=1 // pred_region
      %69 = dma.done [#allocation8], 6144
    $region33: #{self_attention_forward.1} parent=1 // pred_fallthru
      _
    %v70 = vld [vmem:[#allocation2] sm:$0xff]
    %v71 = vld [vmem:[#allocation2 + $0x8] sm:$0xff]
    %v72 = vld [vmem:[#allocation6] sm:$0x1]
    %v73 = vld [vmem:[#allocation6 + $0x1] sm:$0x1]
    %v74 = vld [vmem:[#allocation6 + $0x2] sm:$0x1]
    %v75 = vld [vmem:[#allocation6 + $0x3] sm:$0x1]
    %v76 = vld [vmem:[#allocation4] sm:$0xff]
    %v77 = vld [vmem:[#allocation4 + $0x8] sm:$0xff]
    %v78 = vld [vmem:[#allocation4 + $0x10] sm:$0xff]
    %v79 = vld [vmem:[#allocation4 + $0x18] sm:$0xff]
    %v80 = vlaneseq
    %v81 = vshrl.u32 %v80, 7
    %v82 = vsub.s32 0, %v81
    %v83 = vrot.slane %v72, %v82
    %vm84 = vcmask 261120
    %v86 = vsel %vm84, %v70, 0
    %v89 = vsel %vm84, %v71, 0
    %91 = vmatprep.subr.mxu0 0.0
    %92 = vmatpush1.msra.mxu0 %v76
    %93 = vmatprep.subr.mxu0 0.0
    %94 = vmatpush1.msra.mxu0 %v77
    %95 = vmatprep.subr.mxu0 0.0
    %96 = vmatpush1.msra.mxu0 %v78
    %97 = vmatprep.subr.mxu0 0.0
    %98 = vmatpush1.msra.mxu0 %v79
    %99 = vmatprep.subr.mxu0 0.0
    %100 = vmatpush1.msra.mxu0 0.0
    %101 = vmatprep.subr.mxu0 0.0
    %102 = vmatpush1.msra.mxu0 0.0
    %103 = vmatprep.subr.mxu0 0.0
    %104 = vmatpush1.msra.mxu0 0.0
    %105 = vmatprep.subr.mxu0 0.0
    %106 = vmatpush1.msra.mxu0 0.0
    %107 = vmatprep.subr.mxu0 0.0
    %108 = vmatpush1.msra.mxu0 0.0
    %109 = vmatprep.subr.mxu0 0.0
    %110 = vmatpush1.msra.mxu0 0.0
    %111 = vmatprep.subr.mxu0 0.0
    %112 = vmatpush1.msra.mxu0 0.0
    %113 = vmatprep.subr.mxu0 0.0
    %114 = vmatpush1.msra.mxu0 0.0
    %115 = vmatprep.subr.mxu0 0.0
    %116 = vmatpush1.msra.mxu0 0.0
    %117 = vmatprep.subr.mxu0 0.0
    %118 = vmatpush1.msra.mxu0 0.0
    %119 = vmatprep.subr.mxu0 0.0
    %120 = vmatpush1.msra.mxu0 0.0
    %121 = vmatprep.subr.mxu0 0.0
    %122 = vmatpush1.msra.mxu0 0.0
    %123 = vmatprep.subr.mxu0 0.0
    %124 = vmatpush1.msra.mxu0 0.0
    %125 = vmatprep.subr.mxu0 0.0
    %126 = vmatpush1.msra.mxu0 0.0
    %127 = vmatprep.subr.mxu0 0.0
    %128 = vmatpush1.msra.mxu0 0.0
    %129 = vmatprep.subr.mxu0 0.0
    %130 = vmatpush1.msra.mxu0 0.0
    %131 = vmatprep.subr.mxu0 0.0
    %132 = vmatpush1.msra.mxu0 0.0
    %133 = vmatprep.subr.mxu0 0.0
    %134 = vmatpush1.msra.mxu0 0.0
    %135 = vmatprep.subr.mxu0 0.0
    %136 = vmatpush1.msra.mxu0 0.0
    %137 = vmatprep.subr.mxu0 0.0
    %138 = vmatpush1.msra.mxu0 0.0
    %139 = vmatprep.subr.mxu0 0.0
    %140 = vmatpush1.msra.mxu0 0.0
    %141 = vmatprep.subr.mxu0 0.0
    %142 = vmatpush1.msra.mxu0 0.0
    %143 = vmatprep.subr.mxu0 0.0
    %144 = vmatpush1.msra.mxu0 0.0
    %145 = vmatprep.subr.mxu0 0.0
    %146 = vmatpush1.msra.mxu0 0.0
    %147 = vmatprep.subr.mxu0 0.0
    %148 = vmatpush1.msra.mxu0 0.0
    %149 = vmatprep.subr.mxu0 0.0
    %150 = vmatpush1.msra.mxu0 0.0
    %151 = vmatprep.subr.mxu0 0.0
    %152 = vmatpush1.msra.mxu0 0.0
    %153 = vmatprep.subr.mxu0 0.0
    %154 = vmatpush1.msra.mxu0 0.0
    %155 = vmatprep.mubr.f32.mxu0 0.0
    %156 = vmatmul.mubr.f32.gmra.mrb[0].mxu0 %v86
    %v157 = vpop.f32.mrb[0].mxu0
    %v158 = vadd.f32 %v83, %v157
    %v159 = vpop.f32.mrb[0].mxu0
    %160 = vmatprep.mubr.f32.mxu0 0.0
    %161 = vmatmul.mubr.f32.gmra.mrb[0].mxu0 %v89
    %v162 = vpop.f32.mrb[0].mxu0
    %v163 = vadd.f32 %v83, %v162
    %v164 = vpop.f32.mrb[0].mxu0
    %165 = vdwg.mxu0
    %v166 = vxor.u32 %v158, 2147483648
    %v167 = vxor.u32 %v163, 2147483648
    %v168 = vmul.f32 %v166, 1.442695
    %v169 = vpow.pop %v168
    %v170 = vmul.f32 %v167, 1.442695
    %v171 = vpow.pop %v170
    %v172 = vadd.f32 %v169, 1.0
    %v173 = vadd.f32 %v171, 1.0
    %v174 = vrcp.pop %v172
    %v175 = vmul.f32 1.0, %v174
    %v176 = vrcp.pop %v173
    %v177 = vmul.f32 1.0, %v176
    %v178 = vld [vmem:[#allocation7] sm:$0xff]
    %v179 = vld [vmem:[#allocation7 + $0x8] sm:$0xff]
    %v180 = vld [vmem:[#allocation7 + $0x10] sm:$0xff]
    %v181 = vld [vmem:[#allocation7 + $0x18] sm:$0xff]
    %v182 = vld [vmem:[#allocation7 + $0x20] sm:$0xff]
    %v183 = vld [vmem:[#allocation7 + $0x28] sm:$0xff]
    %v184 = vld [vmem:[#allocation7 + $0x30] sm:$0xff]
    %v185 = vld [vmem:[#allocation7 + $0x38] sm:$0xff]
    %v186 = vld [vmem:[#allocation7 + $0x40] sm:$0xff]
    %v187 = vld [vmem:[#allocation7 + $0x48] sm:$0xff]
    %v188 = vld [vmem:[#allocation7 + $0x50] sm:$0xff]
    %v189 = vld [vmem:[#allocation7 + $0x58] sm:$0xff]
    %v190 = vld [vmem:[#allocation7 + $0x60] sm:$0xff]
    %v191 = vld [vmem:[#allocation7 + $0x68] sm:$0xff]
    %v192 = vld [vmem:[#allocation7 + $0x70] sm:$0xff]
    %v193 = vld [vmem:[#allocation7 + $0x78] sm:$0xff]
    %v194 = vlaneseq
    %v195 = vshrl.u32 %v194, 7
    %v196 = vsub.s32 0, %v195
    %v197 = vrot.slane %v73, %v196
    %198 = vmatprep.subr.mxu0 0.0
    %199 = vmatpush1.msra.mxu0 %v178
    %200 = vmatprep.subr.mxu0 0.0
    %201 = vmatpush1.msra.mxu0 %v179
    %202 = vmatprep.subr.mxu0 0.0
    %203 = vmatpush1.msra.mxu0 %v180
    %204 = vmatprep.subr.mxu0 0.0
    %205 = vmatpush1.msra.mxu0 %v181
    %206 = vmatprep.subr.mxu0 0.0
    %207 = vmatpush1.msra.mxu0 %v182
    %208 = vmatprep.subr.mxu0 0.0
    %209 = vmatpush1.msra.mxu0 %v183
    %210 = vmatprep.subr.mxu0 0.0
    %211 = vmatpush1.msra.mxu0 %v184
    %212 = vmatprep.subr.mxu0 0.0
    %213 = vmatpush1.msra.mxu0 %v185
    %214 = vmatprep.subr.mxu0 0.0
    %215 = vmatpush1.msra.mxu0 %v186
    %216 = vmatprep.subr.mxu0 0.0
    %217 = vmatpush1.msra.mxu0 %v187
    %218 = vmatprep.subr.mxu0 0.0
    %219 = vmatpush1.msra.mxu0 %v188
    %220 = vmatprep.subr.mxu0 0.0
    %221 = vmatpush1.msra.mxu0 %v189
    %222 = vmatprep.subr.mxu0 0.0
    %223 = vmatpush1.msra.mxu0 %v190
    %224 = vmatprep.subr.mxu0 0.0
    %225 = vmatpush1.msra.mxu0 %v191
    %226 = vmatprep.subr.mxu0 0.0
    %227 = vmatpush1.msra.mxu0 %v192
    %228 = vmatprep.subr.mxu0 0.0
    %229 = vmatpush1.msra.mxu0 %v193
    %230 = vmatprep.subr.mxu0 0.0
    %231 = vmatpush1.msra.mxu0 0.0
    %232 = vmatprep.subr.mxu0 0.0
    %233 = vmatpush1.msra.mxu0 0.0
    %234 = vmatprep.subr.mxu0 0.0
    %235 = vmatpush1.msra.mxu0 0.0
    %236 = vmatprep.subr.mxu0 0.0
    %237 = vmatpush1.msra.mxu0 0.0
    %238 = vmatprep.subr.mxu0 0.0
    %239 = vmatpush1.msra.mxu0 0.0
    %240 = vmatprep.subr.mxu0 0.0
    %241 = vmatpush1.msra.mxu0 0.0
    %242 = vmatprep.subr.mxu0 0.0
    %243 = vmatpush1.msra.mxu0 0.0
    %244 = vmatprep.subr.mxu0 0.0
    %245 = vmatpush1.msra.mxu0 0.0
    %246 = vmatprep.subr.mxu0 0.0
    %247 = vmatpush1.msra.mxu0 0.0
    %248 = vmatprep.subr.mxu0 0.0
    %249 = vmatpush1.msra.mxu0 0.0
    %250 = vmatprep.subr.mxu0 0.0
    %251 = vmatpush1.msra.mxu0 0.0
    %252 = vmatprep.subr.mxu0 0.0
    %253 = vmatpush1.msra.mxu0 0.0
    %254 = vmatprep.subr.mxu0 0.0
    %255 = vmatpush1.msra.mxu0 0.0
    %256 = vmatprep.subr.mxu0 0.0
    %257 = vmatpush1.msra.mxu0 0.0
    %258 = vmatprep.subr.mxu0 0.0
    %259 = vmatpush1.msra.mxu0 0.0
    %260 = vmatprep.subr.mxu0 0.0
    %261 = vmatpush1.msra.mxu0 0.0
    %262 = vmatprep.mubr.f32.mxu0 0.0
    %263 = vmatmul.mubr.f32.gmra.mrb[0].mxu0 %v175
    %v264 = vpop.f32.mrb[0].mxu0
    %v265 = vadd.f32 %v197, %v264
    %v266 = vpop.f32.mrb[0].mxu0
    %267 = vmatprep.mubr.f32.mxu0 0.0
    %268 = vmatmul.mubr.f32.gmra.mrb[0].mxu0 %v177
    %v269 = vpop.f32.mrb[0].mxu0
    %v270 = vadd.f32 %v197, %v269
    %v271 = vpop.f32.mrb[0].mxu0
    %272 = vdwg.mxu0
    %v273 = vmax.f32 %v265, 0.0
    %v274 = vmax.f32 %v270, 0.0
    %s275 = scalar_lea.vmem [#allocation7], 128
    %v276 = vld [vmem:[%s275] sm:$0xff]
    %v277 = vld [vmem:[%s275 + $0x8] sm:$0xff]
    %v278 = vld [vmem:[%s275 + $0x10] sm:$0xff]
    %v279 = vld [vmem:[%s275 + $0x18] sm:$0xff]
    %v280 = vld [vmem:[%s275 + $0x20] sm:$0xff]
    %v281 = vld [vmem:[%s275 + $0x28] sm:$0xff]
    %v282 = vld [vmem:[%s275 + $0x30] sm:$0xff]
    %v283 = vld [vmem:[%s275 + $0x38] sm:$0xff]
    %v284 = vld [vmem:[%s275 + $0x40] sm:$0xff]
    %v285 = vld [vmem:[%s275 + $0x48] sm:$0xff]
    %v286 = vld [vmem:[%s275 + $0x50] sm:$0xff]
    %v287 = vld [vmem:[%s275 + $0x58] sm:$0xff]
    %v288 = vld [vmem:[%s275 + $0x60] sm:$0xff]
    %v289 = vld [vmem:[%s275 + $0x68] sm:$0xff]
    %v290 = vld [vmem:[%s275 + $0x70] sm:$0xff]
    %v291 = vld [vmem:[%s275 + $0x78] sm:$0xff]
    %v292 = vlaneseq
    %v293 = vshrl.u32 %v292, 7
    %v294 = vsub.s32 0, %v293
    %v295 = vrot.slane %v74, %v294
    %296 = vmatprep.subr.mxu0 0.0
    %297 = vmatpush1.msra.mxu0 %v276
    %298 = vmatprep.subr.mxu0 0.0
    %299 = vmatpush1.msra.mxu0 %v277
    %300 = vmatprep.subr.mxu0 0.0
    %301 = vmatpush1.msra.mxu0 %v278
    %302 = vmatprep.subr.mxu0 0.0
    %303 = vmatpush1.msra.mxu0 %v279
    %304 = vmatprep.subr.mxu0 0.0
    %305 = vmatpush1.msra.mxu0 %v280
    %306 = vmatprep.subr.mxu0 0.0
    %307 = vmatpush1.msra.mxu0 %v281
    %308 = vmatprep.subr.mxu0 0.0
    %309 = vmatpush1.msra.mxu0 %v282
    %310 = vmatprep.subr.mxu0 0.0
    %311 = vmatpush1.msra.mxu0 %v283
    %312 = vmatprep.subr.mxu0 0.0
    %313 = vmatpush1.msra.mxu0 %v284
    %314 = vmatprep.subr.mxu0 0.0
    %315 = vmatpush1.msra.mxu0 %v285
    %316 = vmatprep.subr.mxu0 0.0
    %317 = vmatpush1.msra.mxu0 %v286
    %318 = vmatprep.subr.mxu0 0.0
    %319 = vmatpush1.msra.mxu0 %v287
    %320 = vmatprep.subr.mxu0 0.0
    %321 = vmatpush1.msra.mxu0 %v288
    %322 = vmatprep.subr.mxu0 0.0
    %323 = vmatpush1.msra.mxu0 %v289
    %324 = vmatprep.subr.mxu0 0.0
    %325 = vmatpush1.msra.mxu0 %v290
    %326 = vmatprep.subr.mxu0 0.0
    %327 = vmatpush1.msra.mxu0 %v291
    %328 = vmatprep.subr.mxu0 0.0
    %329 = vmatpush1.msra.mxu0 0.0
    %330 = vmatprep.subr.mxu0 0.0
    %331 = vmatpush1.msra.mxu0 0.0
    %332 = vmatprep.subr.mxu0 0.0
    %333 = vmatpush1.msra.mxu0 0.0
    %334 = vmatprep.subr.mxu0 0.0
    %335 = vmatpush1.msra.mxu0 0.0
    %336 = vmatprep.subr.mxu0 0.0
    %337 = vmatpush1.msra.mxu0 0.0
    %338 = vmatprep.subr.mxu0 0.0
    %339 = vmatpush1.msra.mxu0 0.0
    %340 = vmatprep.subr.mxu0 0.0
    %341 = vmatpush1.msra.mxu0 0.0
    %342 = vmatprep.subr.mxu0 0.0
    %343 = vmatpush1.msra.mxu0 0.0
    %344 = vmatprep.subr.mxu0 0.0
    %345 = vmatpush1.msra.mxu0 0.0
    %346 = vmatprep.subr.mxu0 0.0
    %347 = vmatpush1.msra.mxu0 0.0
    %348 = vmatprep.subr.mxu0 0.0
    %349 = vmatpush1.msra.mxu0 0.0
    %350 = vmatprep.subr.mxu0 0.0
    %351 = vmatpush1.msra.mxu0 0.0
    %352 = vmatprep.subr.mxu0 0.0
    %353 = vmatpush1.msra.mxu0 0.0
    %354 = vmatprep.subr.mxu0 0.0
    %355 = vmatpush1.msra.mxu0 0.0
    %356 = vmatprep.subr.mxu0 0.0
    %357 = vmatpush1.msra.mxu0 0.0
    %358 = vmatprep.subr.mxu0 0.0
    %359 = vmatpush1.msra.mxu0 0.0
    %360 = vmatprep.mubr.f32.mxu0 0.0
    %361 = vmatmul.mubr.f32.gmra.mrb[0].mxu0 %v273
    %v362 = vpop.f32.mrb[0].mxu0
    %v363 = vadd.f32 %v295, %v362
    %v364 = vpop.f32.mrb[0].mxu0
    %365 = vmatprep.mubr.f32.mxu0 0.0
    %366 = vmatmul.mubr.f32.gmra.mrb[0].mxu0 %v274
    %v367 = vpop.f32.mrb[0].mxu0
    %v368 = vadd.f32 %v295, %v367
    %v369 = vpop.f32.mrb[0].mxu0
    %370 = vdwg.mxu0
    %371 = vadd.xlane.f32.xlu0 %v363
    %v372 = vpop.xlane.xlu0 %371
    %373 = vadd.xlane.f32.xlu0 %v368
    %v374 = vpop.xlane.xlu0 %373
    %v375 = vrcp.pop 128.0
    %v376 = vmul.f32 %v372, %v375
    %v377 = vmul.f32 %v374, %v375
    %v378 = vsub.f32 %v363, %v376
    %v379 = vsub.f32 %v368, %v377
    %v380 = vmul.f32 %v378, %v378
    %v381 = vmul.f32 %v379, %v379
    %382 = vadd.xlane.f32.xlu0 %v380
    %v383 = vpop.xlane.xlu0 %382
    %384 = vadd.xlane.f32.xlu0 %v381
    %v385 = vpop.xlane.xlu0 %384
    %v386 = vmul.f32 %v383, %v375
    %v387 = vmul.f32 %v385, %v375
    %v388 = vadd.f32 %v386, 1e-05
    %v389 = vadd.f32 %v387, 1e-05
    %v390 = vrsqrt.pop %v388
    %v391 = vrsqrt.pop %v389
    %v392 = vmul.f32 %v378, %v390
    %v393 = vmul.f32 %v379, %v391
    %s394 = scalar_lea.vmem [#allocation7], 256
    %v395 = vld [vmem:[%s394] sm:$0xff]
    %v396 = vld [vmem:[%s394 + $0x8] sm:$0xff]
    %v397 = vld [vmem:[%s394 + $0x10] sm:$0xff]
    %v398 = vld [vmem:[%s394 + $0x18] sm:$0xff]
    %v399 = vld [vmem:[%s394 + $0x20] sm:$0xff]
    %v400 = vld [vmem:[%s394 + $0x28] sm:$0xff]
    %v401 = vld [vmem:[%s394 + $0x30] sm:$0xff]
    %v402 = vld [vmem:[%s394 + $0x38] sm:$0xff]
    %v403 = vld [vmem:[%s394 + $0x40] sm:$0xff]
    %v404 = vld [vmem:[%s394 + $0x48] sm:$0xff]
    %v405 = vld [vmem:[%s394 + $0x50] sm:$0xff]
    %v406 = vld [vmem:[%s394 + $0x58] sm:$0xff]
    %v407 = vld [vmem:[%s394 + $0x60] sm:$0xff]
    %v408 = vld [vmem:[%s394 + $0x68] sm:$0xff]
    %v409 = vld [vmem:[%s394 + $0x70] sm:$0xff]
    %v410 = vld [vmem:[%s394 + $0x78] sm:$0xff]
    %v411 = vlaneseq
    %v412 = vshrl.u32 %v411, 7
    %v413 = vsub.s32 0, %v412
    %v414 = vrot.slane %v75, %v413
    %415 = vmatprep.subr.mxu0 0.0
    %416 = vmatpush1.msra.mxu0 %v395
    %417 = vmatprep.subr.mxu0 0.0
    %418 = vmatpush1.msra.mxu0 %v396
    %419 = vmatprep.subr.mxu0 0.0
    %420 = vmatpush1.msra.mxu0 %v397
    %421 = vmatprep.subr.mxu0 0.0
    %422 = vmatpush1.msra.mxu0 %v398
    %423 = vmatprep.subr.mxu0 0.0
    %424 = vmatpush1.msra.mxu0 %v399
    %425 = vmatprep.subr.mxu0 0.0
    %426 = vmatpush1.msra.mxu0 %v400
    %427 = vmatprep.subr.mxu0 0.0
    %428 = vmatpush1.msra.mxu0 %v401
    %429 = vmatprep.subr.mxu0 0.0
    %430 = vmatpush1.msra.mxu0 %v402
    %431 = vmatprep.subr.mxu0 0.0
    %432 = vmatpush1.msra.mxu0 %v403
    %433 = vmatprep.subr.mxu0 0.0
    %434 = vmatpush1.msra.mxu0 %v404
    %435 = vmatprep.subr.mxu0 0.0
    %436 = vmatpush1.msra.mxu0 %v405
    %437 = vmatprep.subr.mxu0 0.0
    %438 = vmatpush1.msra.mxu0 %v406
    %439 = vmatprep.subr.mxu0 0.0
    %440 = vmatpush1.msra.mxu0 %v407
    %441 = vmatprep.subr.mxu0 0.0
    %442 = vmatpush1.msra.mxu0 %v408
    %443 = vmatprep.subr.mxu0 0.0
    %444 = vmatpush1.msra.mxu0 %v409
    %445 = vmatprep.subr.mxu0 0.0
    %446 = vmatpush1.msra.mxu0 %v410
    %447 = vmatprep.subr.mxu0 0.0
    %448 = vmatpush1.msra.mxu0 0.0
    %449 = vmatprep.subr.mxu0 0.0
    %450 = vmatpush1.msra.mxu0 0.0
    %451 = vmatprep.subr.mxu0 0.0
    %452 = vmatpush1.msra.mxu0 0.0
    %453 = vmatprep.subr.mxu0 0.0
    %454 = vmatpush1.msra.mxu0 0.0
    %455 = vmatprep.subr.mxu0 0.0
    %456 = vmatpush1.msra.mxu0 0.0
    %457 = vmatprep.subr.mxu0 0.0
    %458 = vmatpush1.msra.mxu0 0.0
    %459 = vmatprep.subr.mxu0 0.0
    %460 = vmatpush1.msra.mxu0 0.0
    %461 = vmatprep.subr.mxu0 0.0
    %462 = vmatpush1.msra.mxu0 0.0
    %463 = vmatprep.subr.mxu0 0.0
    %464 = vmatpush1.msra.mxu0 0.0
    %465 = vmatprep.subr.mxu0 0.0
    %466 = vmatpush1.msra.mxu0 0.0
    %467 = vmatprep.subr.mxu0 0.0
    %468 = vmatpush1.msra.mxu0 0.0
    %469 = vmatprep.subr.mxu0 0.0
    %470 = vmatpush1.msra.mxu0 0.0
    %471 = vmatprep.subr.mxu0 0.0
    %472 = vmatpush1.msra.mxu0 0.0
    %473 = vmatprep.subr.mxu0 0.0
    %474 = vmatpush1.msra.mxu0 0.0
    %475 = vmatprep.subr.mxu0 0.0
    %476 = vmatpush1.msra.mxu0 0.0
    %477 = vmatprep.subr.mxu0 0.0
    %478 = vmatpush1.msra.mxu0 0.0
    %479 = vmatprep.mubr.f32.mxu0 0.0
    %480 = vmatmul.mubr.f32.gmra.mrb[0].mxu0 %v392
    %v481 = vpop.f32.mrb[0].mxu0
    %v482 = vadd.f32 %v414, %v481
    %v483 = vpop.f32.mrb[0].mxu0
    %484 = vmatprep.mubr.f32.mxu0 0.0
    %485 = vmatmul.mubr.f32.gmra.mrb[0].mxu0 %v393
    %v486 = vpop.f32.mrb[0].mxu0
    %v487 = vadd.f32 %v414, %v486
    %v488 = vpop.f32.mrb[0].mxu0
    %489 = vdwg.mxu0
    %v490 = vxor.u32 %v482, 2147483648
    %v491 = vxor.u32 %v487, 2147483648
    %v492 = vmul.f32 %v490, 1.442695
    %v493 = vpow.pop %v492
    %v494 = vmul.f32 %v491, 1.442695
    %v495 = vpow.pop %v494
    %v496 = vadd.f32 %v493, 1.0
    %v497 = vadd.f32 %v495, 1.0
    %v498 = vrcp.pop %v496
    %v499 = vmul.f32 1.0, %v498
    %v500 = vrcp.pop %v497
    %v501 = vmul.f32 1.0, %v500
    %502 = vst [vmem:[%s4] sm:$0xff] %v499
    %503 = vst [vmem:[%s4 + $0x8] sm:$0xff] %v501
    // Predicated region
    $region34: #{self_attention_forward.1} parent=1 // pred_check
      _
    $region35: #{self_attention_forward.1} parent=1 // pred_check_branch
      %505 = sbr.rel (0) target = $region37
    $region36: #{self_attention_forward.1} parent=1 // pred_region
      _
    $region37: #{self_attention_forward.1} parent=1 // pred_fallthru
      _
    // Predicated region
    $region38: #{self_attention_forward.1} parent=1 // pred_check
      _
    $region39: #{self_attention_forward.1} parent=1 // pred_check_branch
      %507 = sbr.rel (0) target = $region41
    $region40: #{self_attention_forward.1} parent=1 // pred_region
      _
    $region41: #{self_attention_forward.1} parent=1 // pred_fallthru
      _
    %508 = vsyncpa [#allocation3], 1
    %509 = vsyncpa [#allocation5], 1
    %510 = vsyncpa [#allocation8], 1

</llo_original>
